<compile_context>
chip_gen: v7x
topology: tpu7x:2x2x1
jax: 0.10.0
libtpu: 0.0.40
codegen_flags: <defaults>
</compile_context>

<pallas_src>
import math
from functools import partial

import jax
import jax.numpy as jnp
from jax.experimental import pallas as pl
from jax.experimental.pallas import tpu as pltpu


# --------------------------------------------------------------------------
# Kernel
# --------------------------------------------------------------------------
def _self_attention_kernel(x_ref, wqkv_ref, wo_ref, o_ref,
                           qkv_ref, oheads_ref, *, num_heads, head_dims):
    """One batch-tile of SelfAttention.

    x_ref      : (Bt, N, D)    f32    input tile
    wqkv_ref   : (D, 3*P)      bf16   fused [Wq*scale | Wk | Wv] (transposed)
    wo_ref     : (P, P)        bf16   Wo (transposed)
    o_ref      : (Bt, N, P)    f32    output tile
    qkv_ref    : (Bt, N, 3*P)  bf16   VMEM scratch (fused projection result)
    oheads_ref : (Bt*N, P)     bf16   VMEM scratch (concatenated head outputs)
    """
    Bt, N, D = x_ref.shape
    P = num_heads * head_dims
    R = Bt * N

    # ---- fused Q/K/V projection: one bf16 MXU matmul over all Bt*N rows ---
    # (N is a multiple of the f32 sublane (8) here, so the flatten is a
    #  zero-cost relayout; otherwise keep 3-D operands / pad N.)
    x2d = x_ref[...].reshape(R, D).astype(jnp.bfloat16)              # (R, D)
    qkv = jnp.dot(x2d, wqkv_ref[...],
                  preferred_element_type=jnp.float32)                # (R, 3P) f32
    qkv_ref[...] = qkv.reshape(Bt, N, 3 * P).astype(jnp.bfloat16)

    # ---- per-head attention; heads written side-by-side into oheads_ref ---
    # num_heads is a tiny static constant (2): static unroll is fine, and
    # slicing the scratch *ref* keeps per-head live ranges bounded (the big
    # (R,3P) value above is dead once parked in scratch).
    # TODO(synk): for num_heads > ~4 make this a lax.fori_loop(unroll=True)
    # or a grid axis; for N >= ~1k switch to a KV-tiled online softmax so the
    # (Bt,N,N) logits never materialize (mandatory on v7x's 64 MiB VMEM).
    for h in range(num_heads):
        lo = h * head_dims
        qh = qkv_ref[:, :, lo:lo + head_dims]                         # (Bt,N,Hd) bf16
        kh = qkv_ref[:, :, P + lo:P + lo + head_dims]                 # (Bt,N,Hd) bf16
        vh = qkv_ref[:, :, 2 * P + lo:2 * P + lo + head_dims]         # (Bt,N,Hd) bf16

        # q already carries the 1/sqrt(head_dims) scale (folded into W_Q);
        # contraction is on the last dim of both operands -> no k transpose.
        # Note: for tiny N the (N,N) logits use only N of 128 lanes; with
        # realistic N, KV-tiling in multiples of 128 makes this lane-dense.
        logits = jnp.einsum("bqd,bkd->bqk", qh, kh,
                            preferred_element_type=jnp.float32)       # (Bt,N,N) f32

        # Numerically-stable softmax in f32 on the VPU; division deferred.
        m = jnp.max(logits, axis=-1, keepdims=True)
        p = jnp.exp(logits - m)                                       # (Bt,N,N)
        denom = jnp.sum(p, axis=-1, keepdims=True)                    # (Bt,N,1)

        o_h = jnp.einsum("bqk,bkd->bqd", p.astype(jnp.bfloat16), vh,
                         preferred_element_type=jnp.float32)          # (Bt,N,Hd) f32
        o_h = o_h * pl.reciprocal(denom, approx=True)                 # EUP slot

        # Lane-aligned (128-wide, 128-offset) static-slice store; no concat,
        # no per-head W_O matmul, no f32 accumulator read-modify-write.
        oheads_ref[:, lo:lo + head_dims] = (
            o_h.reshape(R, head_dims).astype(jnp.bfloat16))

    # ---- single output projection: K = P = 256 fills the MXU K dim --------
    out = jnp.dot(oheads_ref[...], wo_ref[...],
                  preferred_element_type=jnp.float32)                 # (R, P) f32
    # Lane-dense store: last dim P = 256 (multiple of 128), rows mult. of 8.
    o_ref[...] = out.reshape(Bt, N, P).astype(o_ref.dtype)


# --------------------------------------------------------------------------
# Tiling heuristics
# --------------------------------------------------------------------------
def _vmem_bytes_estimate(Bt, N, D, P):
    """Rough per-grid-step VMEM footprint (double-buffered I/O + scratch)."""
    f32, bf16 = 4, 2
    rows = Bt * N
    est = 0
    est += 2 * rows * D * f32                 # x tiles (double-buffered)
    est += 2 * rows * P * f32                 # output tiles (double-buffered)
    est += 2 * (D * 3 * P + P * P) * bf16     # weights (double-buffered, bf16)
    est += rows * 3 * P * bf16                # qkv scratch
    est += rows * P * bf16                    # per-head output scratch
    est += 3 * rows * N * f32                 # logits / exp live values
    est += 2 * rows * P * f32                 # matmul result temporaries
    return est


def _pick_batch_tile(B, N, D, P, *, row_target=256, min_grid_steps=2,
                     vmem_budget=48 * 1024 * 1024):
    """Largest divisor of B with Bt*N <= row_target, keeping >= min_grid_steps
    grid steps when possible (v7x has 2 TensorCores) and fitting the VMEM
    budget (conservative for v7x's 64 MiB).  row_target=256 fills the
    v6e/v7x MXU; 128 would be the v5e target."""
    divs = [d for d in range(1, B + 1) if B % d == 0]
    cands = [d for d in divs if B // d >= min_grid_steps] or divs
    fitting = [d for d in cands
               if d * N <= row_target
               and _vmem_bytes_estimate(d, N, D, P) <= vmem_budget]
    if fitting:
        return max(fitting)
    ok = [d for d in cands if _vmem_bytes_estimate(d, N, D, P) <= vmem_budget]
    return min(ok) if ok else min(cands)


# --------------------------------------------------------------------------
# Wrappers
# --------------------------------------------------------------------------
def prepare_self_attention_params(wq, wk, wv, wo, *, head_dims):
    """Fold 1/sqrt(head_dims) into W_Q, fuse [Wq|Wk|Wv] into one (D, 3P)
    matrix, transpose to (in, out) layout and cast to bf16.

    Call ONCE at parameter-load time (not per forward call).
    Inputs are PyTorch-layout (out_features, in_features) f32 weights.
    """
    scale = 1.0 / math.sqrt(head_dims)
    wqkv_t = jnp.concatenate([wq.T * scale, wk.T, wv.T], axis=1)      # (D, 3P)
    return wqkv_t.astype(jnp.bfloat16), wo.T.astype(jnp.bfloat16)


def self_attention_pallas(x, wqkv_t, wo_t, *, num_heads, head_dims,
                          batch_tile=None, out_dtype=None):
    """x: (B, N, D) f32; wqkv_t: (D, 3P) bf16; wo_t: (P, P) bf16.

    Returns (B, N, P) in out_dtype (default: x.dtype, matching the module).
    # TODO(synk): if downstream accepts bf16, pass out_dtype=jnp.bfloat16 to
    # halve HBM writeback of the largest streamed tensor.
    """
    B, N, D = x.shape
    P = num_heads * head_dims
    assert wqkv_t.shape == (D, 3 * P), wqkv_t.shape
    assert wo_t.shape == (P, P), wo_t.shape
    if out_dtype is None:
        out_dtype = x.dtype

    if batch_tile is None:
        batch_tile = _pick_batch_tile(B, N, D, P)
    assert B % batch_tile == 0
    Bt = batch_tile
    grid = (B // Bt,)

    kernel = partial(_self_attention_kernel,
                     num_heads=num_heads, head_dims=head_dims)

    return pl.pallas_call(
        kernel,
        out_shape=jax.ShapeDtypeStruct((B, N, P), out_dtype),
        grid_spec=pltpu.PrefetchScalarGridSpec(
            num_scalar_prefetch=0,
            grid=grid,
            in_specs=[
                pl.BlockSpec((Bt, N, D), lambda b: (b, 0, 0)),    # x batch tile
                pl.BlockSpec((D, 3 * P), lambda b: (0, 0)),       # fused W_QKV^T (bf16)
                pl.BlockSpec((P, P), lambda b: (0, 0)),           # W_O^T (bf16)
            ],
            out_specs=pl.BlockSpec((Bt, N, P), lambda b: (b, 0, 0)),
            scratch_shapes=[
                pltpu.VMEM((Bt, N, 3 * P), jnp.bfloat16),         # qkv scratch
                pltpu.VMEM((Bt * N, P), jnp.bfloat16),            # head outputs
            ],
        ),
        compiler_params=pltpu.CompilerParams(
            dimension_semantics=("parallel",),
            vmem_limit_bytes=64 * 1024 * 1024,
        ),
    )(x, wqkv_t, wo_t)


# --------------------------------------------------------------------------
# Reference + test
# --------------------------------------------------------------------------
def _xavier_normal(key, out_features, in_features):
    # torch.nn.init.xavier_normal_ on a (out, in) Linear weight.
    std = math.sqrt(2.0 / (in_features + out_features))
    return std * jax.random.normal(key, (out_features, in_features), jnp.float32)


def _reference(x, wq_t, wk_t, wv_t, wo_t, num_heads, head_dims):
    # Pure-f32 JAX reference matching the PyTorch forward exactly.
    b, n, d = x.shape
    q = x @ wq_t
    k = x @ wk_t
    v = x @ wv_t

    def split(z):
        return z.reshape(b, n, num_heads, head_dims).transpose(0, 2, 1, 3)

    q, k, v = map(split, (q, k, v))
    logits = jnp.einsum("bhqd,bhkd->bhqk", q, k) / math.sqrt(head_dims)
    w = jax.nn.softmax(logits, axis=-1)
    o = jnp.einsum("bhqk,bhkd->bhqd", w, v).transpose(0, 2, 1, 3)
    o = o.reshape(b, n, num_heads * head_dims)
    return o @ wo_t


if __name__ == "__main__":
    # Small shapes consistent with the module's forward: x is (b, n, d).
    B, N, D = 2, 8, 32
    HEAD_DIMS, NUM_HEADS = 128, 2
    P = HEAD_DIMS * NUM_HEADS

    key = jax.random.PRNGKey(0)
    kx, kq, kk, kv, ko = jax.random.split(key, 5)

    x = jax.random.normal(kx, (B, N, D), jnp.float32)

    # PyTorch Linear weights are (out, in); xavier_normal init, bias=False.
    wq = _xavier_normal(kq, P, D)
    wk = _xavier_normal(kk, P, D)
    wv = _xavier_normal(kv, P, D)
    wo = _xavier_normal(ko, P, P)

    # Prepare fused bf16 weights ONCE (parameter-load time).
    wqkv_t, wo_t_bf16 = prepare_self_attention_params(
        wq, wk, wv, wo, head_dims=HEAD_DIMS)

    out = self_attention_pallas(x, wqkv_t, wo_t_bf16,
                                num_heads=NUM_HEADS, head_dims=HEAD_DIMS)
    out = jax.block_until_ready(out)

    ref = _reference(x, wq.T, wk.T, wv.T, wo.T, NUM_HEADS, HEAD_DIMS)
    assert out.shape == (B, N, P)
    # bf16 MXU operands/weights (f32 accumulation) + approx reciprocal =>
    # compare to the f32 reference with a correspondingly relaxed tolerance.
    assert jnp.allclose(out, ref, atol=5e-2, rtol=5e-2), (
        float(jnp.max(jnp.abs(out - ref))))

    print("KERNEL_OK")
</pallas_src>

<mosaic_0001>
module attributes {stable_mosaic.version = 11 : i64} {
  func.func @_self_attention_kernel(%arg0: i32, %arg1: memref<1x8x32xf32, #tpu.memory_space<vmem>>, %arg2: memref<32x768xbf16, #tpu.memory_space<vmem>>, %arg3: memref<256x256xbf16, #tpu.memory_space<vmem>>, %arg4: memref<1x8x256xf32, #tpu.memory_space<vmem>>, %arg5: memref<1x8x768xbf16, #tpu.memory_space<vmem>>, %arg6: memref<8x256xbf16, #tpu.memory_space<vmem>>) attributes {dimension_semantics = [#tpu.dimension_semantics<parallel>], iteration_bounds = array<i64: 2>, scalar_prefetch = 0 : i64, scratch_operands = 2 : i64, tpu.core_type = #tpu.core_type<tc>, window_params = [{transform_indices = @transform_0, window_bounds = array<i64: 1, 8, 32>}, {pipeline_mode = #tpu.pipeline_mode<synchronous>, transform_indices = @transform_1, window_bounds = array<i64: 32, 768>}, {pipeline_mode = #tpu.pipeline_mode<synchronous>, transform_indices = @transform_2, window_bounds = array<i64: 256, 256>}, {transform_indices = @transform_3, window_bounds = array<i64: 1, 8, 256>}]} {
    %c0 = arith.constant 0 : index
    %c0_0 = arith.constant 0 : index
    %c0_1 = arith.constant 0 : index
    %0 = vector.load %arg1[%c0, %c0_0, %c0_1] : memref<1x8x32xf32, #tpu.memory_space<vmem>>, vector<1x8x32xf32>
    %1 = vector.shape_cast %0 : vector<1x8x32xf32> to vector<8x32xf32>
    %2 = arith.truncf %1 : vector<8x32xf32> to vector<8x32xbf16>
    %c0_2 = arith.constant 0 : index
    %c0_3 = arith.constant 0 : index
    %3 = vector.load %arg2[%c0_2, %c0_3] : memref<32x768xbf16, #tpu.memory_space<vmem>>, vector<32x768xbf16>
    %cst = arith.constant dense<0.000000e+00> : vector<8x768xf32>
    %4 = tpu.matmul %2, %3, %cst {dimension_numbers = #tpu.dot_dimension_numbers<[1], [0], [0], [1], [0, 0, 1, 1], [], []>} : vector<8x32xbf16>, vector<32x768xbf16>, vector<8x768xf32> -> vector<8x768xf32>
    %5 = vector.shape_cast %4 : vector<8x768xf32> to vector<1x8x768xf32>
    %6 = arith.truncf %5 : vector<1x8x768xf32> to vector<1x8x768xbf16>
    %c0_4 = arith.constant 0 : index
    %c0_5 = arith.constant 0 : index
    %c0_6 = arith.constant 0 : index
    %7 = vector.load %arg5[%c0_4, %c0_5, %c0_6] : memref<1x8x768xbf16, #tpu.memory_space<vmem>>, vector<1x8x768xbf16>
    tpu.vector_store %arg5[%c0_4, %c0_5, %c0_6], %6 {strides = array<i32>} : memref<1x8x768xbf16, #tpu.memory_space<vmem>>, vector<1x8x768xbf16>,
    %c0_7 = arith.constant 0 : index
    %c0_8 = arith.constant 0 : index
    %c0_9 = arith.constant 0 : index
    %8 = vector.load %arg5[%c0_7, %c0_8, %c0_9] : memref<1x8x768xbf16, #tpu.memory_space<vmem>>, vector<1x8x128xbf16>
    %c0_10 = arith.constant 0 : index
    %c0_11 = arith.constant 0 : index
    %c256 = arith.constant 256 : index
    %9 = vector.load %arg5[%c0_10, %c0_11, %c256] : memref<1x8x768xbf16, #tpu.memory_space<vmem>>, vector<1x8x128xbf16>
    %c0_12 = arith.constant 0 : index
    %c0_13 = arith.constant 0 : index
    %c512 = arith.constant 512 : index
    %10 = vector.load %arg5[%c0_12, %c0_13, %c512] : memref<1x8x768xbf16, #tpu.memory_space<vmem>>, vector<1x8x128xbf16>
    "tpu.trace_start"() <{level = 10 : i32, message = "bqd,bkd->bqk"}> : () -> ()
    %cst_14 = arith.constant dense<0.000000e+00> : vector<1x8x8xf32>
    %11 = tpu.matmul %8, %9, %cst_14 {dimension_numbers = #tpu.dot_dimension_numbers<[2], [2], [1], [1], [0, 0, 0, 1, 1, 1], [0], [0]>} : vector<1x8x128xbf16>, vector<1x8x128xbf16>, vector<1x8x8xf32> -> vector<1x8x8xf32>
    "tpu.trace_stop"() : () -> ()
    %cst_15 = arith.constant dense<0xFF800000> : vector<1x8xf32>
    %12 = vector.multi_reduction <maximumf>, %11, %cst_15 [2] : vector<1x8x8xf32> to vector<1x8xf32>
    %13 = vector.shape_cast %12 : vector<1x8xf32> to vector<1x8x1xf32>
    %14 = vector.broadcast %13 : vector<1x8x1xf32> to vector<1x8x8xf32>
    %15 = arith.subf %11, %14 : vector<1x8x8xf32>
    %16 = math.exp %15 : vector<1x8x8xf32>
    %cst_16 = arith.constant dense<0.000000e+00> : vector<1x8xf32>
    %17 = vector.multi_reduction <add>, %16, %cst_16 [2] : vector<1x8x8xf32> to vector<1x8xf32>
    %18 = vector.shape_cast %17 : vector<1x8xf32> to vector<1x8x1xf32>
    %19 = arith.truncf %16 : vector<1x8x8xf32> to vector<1x8x8xbf16>
    "tpu.trace_start"() <{level = 10 : i32, message = "bqk,bkd->bqd"}> : () -> ()
    %cst_17 = arith.constant dense<0.000000e+00> : vector<1x8x128xf32>
    %20 = tpu.matmul %19, %10, %cst_17 {dimension_numbers = #tpu.dot_dimension_numbers<[2], [1], [1], [2], [0, 0, 0, 1, 1, 2], [0], [0]>} : vector<1x8x8xbf16>, vector<1x8x128xbf16>, vector<1x8x128xf32> -> vector<1x8x128xf32>
    "tpu.trace_stop"() : () -> ()
    %21 = tpu.reciprocal %18 {approx = true} : vector<1x8x1xf32> -> vector<1x8x1xf32>
    %22 = vector.broadcast %21 : vector<1x8x1xf32> to vector<1x8x128xf32>
    %23 = arith.mulf %20, %22 : vector<1x8x128xf32>
    %24 = vector.shape_cast %23 : vector<1x8x128xf32> to vector<8x128xf32>
    %25 = arith.truncf %24 : vector<8x128xf32> to vector<8x128xbf16>
    %c0_18 = arith.constant 0 : index
    %c0_19 = arith.constant 0 : index
    %26 = vector.load %arg6[%c0_18, %c0_19] : memref<8x256xbf16, #tpu.memory_space<vmem>>, vector<8x128xbf16>
    tpu.vector_store %arg6[%c0_18, %c0_19], %25 {strides = array<i32>} : memref<8x256xbf16, #tpu.memory_space<vmem>>, vector<8x128xbf16>,
    %c0_20 = arith.constant 0 : index
    %c0_21 = arith.constant 0 : index
    %c128 = arith.constant 128 : index
    %27 = vector.load %arg5[%c0_20, %c0_21, %c128] : memref<1x8x768xbf16, #tpu.memory_space<vmem>>, vector<1x8x128xbf16>
    %c0_22 = arith.constant 0 : index
    %c0_23 = arith.constant 0 : index
    %c384 = arith.constant 384 : index
    %28 = vector.load %arg5[%c0_22, %c0_23, %c384] : memref<1x8x768xbf16, #tpu.memory_space<vmem>>, vector<1x8x128xbf16>
    %c0_24 = arith.constant 0 : index
    %c0_25 = arith.constant 0 : index
    %c640 = arith.constant 640 : index
    %29 = vector.load %arg5[%c0_24, %c0_25, %c640] : memref<1x8x768xbf16, #tpu.memory_space<vmem>>, vector<1x8x128xbf16>
    "tpu.trace_start"() <{level = 10 : i32, message = "bqd,bkd->bqk"}> : () -> ()
    %cst_26 = arith.constant dense<0.000000e+00> : vector<1x8x8xf32>
    %30 = tpu.matmul %27, %28, %cst_26 {dimension_numbers = #tpu.dot_dimension_numbers<[2], [2], [1], [1], [0, 0, 0, 1, 1, 1], [0], [0]>} : vector<1x8x128xbf16>, vector<1x8x128xbf16>, vector<1x8x8xf32> -> vector<1x8x8xf32>
    "tpu.trace_stop"() : () -> ()
    %cst_27 = arith.constant dense<0xFF800000> : vector<1x8xf32>
    %31 = vector.multi_reduction <maximumf>, %30, %cst_27 [2] : vector<1x8x8xf32> to vector<1x8xf32>
    %32 = vector.shape_cast %31 : vector<1x8xf32> to vector<1x8x1xf32>
    %33 = vector.broadcast %32 : vector<1x8x1xf32> to vector<1x8x8xf32>
    %34 = arith.subf %30, %33 : vector<1x8x8xf32>
    %35 = math.exp %34 : vector<1x8x8xf32>
    %cst_28 = arith.constant dense<0.000000e+00> : vector<1x8xf32>
    %36 = vector.multi_reduction <add>, %35, %cst_28 [2] : vector<1x8x8xf32> to vector<1x8xf32>
    %37 = vector.shape_cast %36 : vector<1x8xf32> to vector<1x8x1xf32>
    %38 = arith.truncf %35 : vector<1x8x8xf32> to vector<1x8x8xbf16>
    "tpu.trace_start"() <{level = 10 : i32, message = "bqk,bkd->bqd"}> : () -> ()
    %cst_29 = arith.constant dense<0.000000e+00> : vector<1x8x128xf32>
    %39 = tpu.matmul %38, %29, %cst_29 {dimension_numbers = #tpu.dot_dimension_numbers<[2], [1], [1], [2], [0, 0, 0, 1, 1, 2], [0], [0]>} : vector<1x8x8xbf16>, vector<1x8x128xbf16>, vector<1x8x128xf32> -> vector<1x8x128xf32>
    "tpu.trace_stop"() : () -> ()
    %40 = tpu.reciprocal %37 {approx = true} : vector<1x8x1xf32> -> vector<1x8x1xf32>
    %41 = vector.broadcast %40 : vector<1x8x1xf32> to vector<1x8x128xf32>
    %42 = arith.mulf %39, %41 : vector<1x8x128xf32>
    %43 = vector.shape_cast %42 : vector<1x8x128xf32> to vector<8x128xf32>
    %44 = arith.truncf %43 : vector<8x128xf32> to vector<8x128xbf16>
    %c0_30 = arith.constant 0 : index
    %c128_31 = arith.constant 128 : index
    %45 = vector.load %arg6[%c0_30, %c128_31] : memref<8x256xbf16, #tpu.memory_space<vmem>>, vector<8x128xbf16>
    tpu.vector_store %arg6[%c0_30, %c128_31], %44 {strides = array<i32>} : memref<8x256xbf16, #tpu.memory_space<vmem>>, vector<8x128xbf16>,
    %c0_32 = arith.constant 0 : index
    %c0_33 = arith.constant 0 : index
    %46 = vector.load %arg6[%c0_32, %c0_33] : memref<8x256xbf16, #tpu.memory_space<vmem>>, vector<8x256xbf16>
    %c0_34 = arith.constant 0 : index
    %c0_35 = arith.constant 0 : index
    %47 = vector.load %arg3[%c0_34, %c0_35] : memref<256x256xbf16, #tpu.memory_space<vmem>>, vector<256x256xbf16>
    %cst_36 = arith.constant dense<0.000000e+00> : vector<8x256xf32>
    %48 = tpu.matmul %46, %47, %cst_36 {dimension_numbers = #tpu.dot_dimension_numbers<[1], [0], [0], [1], [0, 0, 1, 1], [], []>} : vector<8x256xbf16>, vector<256x256xbf16>, vector<8x256xf32> -> vector<8x256xf32>
    %49 = vector.shape_cast %48 : vector<8x256xf32> to vector<1x8x256xf32>
    %c0_37 = arith.constant 0 : index
    %c0_38 = arith.constant 0 : index
    %c0_39 = arith.constant 0 : index
    %50 = vector.load %arg4[%c0_37, %c0_38, %c0_39] : memref<1x8x256xf32, #tpu.memory_space<vmem>>, vector<1x8x256xf32>
    tpu.vector_store %arg4[%c0_37, %c0_38, %c0_39], %49 {strides = array<i32>} : memref<1x8x256xf32, #tpu.memory_space<vmem>>, vector<1x8x256xf32>,
    return
  }
  func.func @transform_0(%arg0: i32) -> (i32, i32, i32) {
    %c0_i32 = arith.constant 0 : i32
    %c0_i32_0 = arith.constant 0 : i32
    %c0_i32_1 = arith.constant 0 : i32
    return %arg0, %c0_i32, %c0_i32_0 : i32, i32, i32
  }
  func.func @transform_1(%arg0: i32) -> (i32, i32) {
    %c0_i32 = arith.constant 0 : i32
    %c0_i32_0 = arith.constant 0 : i32
    %c0_i32_1 = arith.constant 0 : i32
    return %c0_i32, %c0_i32_0 : i32, i32
  }
  func.func @transform_2(%arg0: i32) -> (i32, i32) {
    %c0_i32 = arith.constant 0 : i32
    %c0_i32_0 = arith.constant 0 : i32
    %c0_i32_1 = arith.constant 0 : i32
    return %c0_i32, %c0_i32_0 : i32, i32
  }
  func.func @transform_3(%arg0: i32) -> (i32, i32, i32) {
    %c0_i32 = arith.constant 0 : i32
    %c0_i32_0 = arith.constant 0 : i32
    %c0_i32_1 = arith.constant 0 : i32
    return %arg0, %c0_i32, %c0_i32_0 : i32, i32, i32
  }
}

</mosaic_0001>

<llo_original>
// kernel: tpu_custom_call.1
$region0: #{tpu_custom_call.1}
  #allocation0 [shape = 'u32[]', space=smem, size = 0x4, offset = 0x4, fixed_abs, tag = 'smem constant byte address 0x4 - core index']
  #allocation1 [shape = 'u32[144,128]{1,0:T(1,128)}', space=vmem, size = 0x12000, scoped, tag = 'internal scratch']
  #allocation2 [shape = 'bf16[1,8,768]{2,1,0:T(8,128)(2,1)}', space=vmem, size = 0x3000, scoped, tag = 'scratch operand']
  #allocation3 [shape = 'bf16[8,256]{1,0:T(8,128)(2,1)}', space=vmem, size = 0x1000, scoped, tag = 'scratch operand']
  %s0 = inlined_call_operand.hbm [shape: f32[2,8,32], index: 0, kind: input, shape index: {}]
  %s1 = inlined_call_operand.hbm [shape: bf16[32,768], index: 1, kind: input, shape index: {}]
  %s2 = inlined_call_operand.hbm [shape: bf16[256,256], index: 2, kind: input, shape index: {}]
  %s3 = inlined_call_operand.hbm [shape: f32[2,8,256], index: 3, kind: output, shape index: {}]
  %s4 = sld [smem:[#allocation0]]
  $region57: #{tpu_custom_call.1} parent=0
    _
  %s6 = ssub.s32 1, %s4
  %s7 = scalar_select 0, %s6, %s4
  $region1: #{tpu_custom_call.1} parent=0
    #allocation4 [shape = 'u8[8192]{0}', space=vmem, size = 0x2000, scoped, tag = 'input window, operand 0']
    #allocation5 [shape = 's32[2]{0}', space=sflag, size = 0x8, scoped, tag = 'scoped memory for tpu_custom_call.1']
    #allocation6 [shape = 's32[2]{0}', space=sflag, size = 0x8, scoped, tag = 'scoped memory for tpu_custom_call.1']
    #allocation7 [shape = 'u8[49152]{0}', space=vmem, size = 0xc000, scoped, tag = 'input window, operand 1, single buffered']
    #allocation8 [shape = 's32[1]{0}', space=sflag, size = 0x4, scoped, tag = 'scoped memory for tpu_custom_call.1']
    #allocation9 [shape = 'u8[131072]{0}', space=vmem, size = 0x20000, scoped, tag = 'input window, operand 2, single buffered']
    #allocation10 [shape = 'u8[16384]{0}', space=vmem, size = 0x4000, scoped, tag = 'output window, operand 0']
    %8 = vsyncpa [#allocation5], 0
    %s9 = scalar_lea.sflag [#allocation5], 1
    %10 = vsyncpa %s9, 0
    %11 = vsyncpa [#allocation8], 0
    %12 = vsyncpa [#allocation6], 0
    %s13 = scalar_lea.sflag [#allocation6], 1
    %14 = vsyncpa %s13, 0
    loop: start=0, step=1, limit=4
    $region2: #{tpu_custom_call.1} parent=1 // loop_pre_header
      _
    $region3: #{tpu_custom_call.1} parent=1 // loop_header
      %s16 = sphi 0, %s20
      %p17 = scmp.ge.s32.totalorder %s16, 4
      %s26 = sphi 0, %s28
      %s29 = sphi 0, %s26
      %s30 = sphi 0, %s29
      %s46 = sphi 0, %s30
      %s50 = sphi 0, %s50
      %s52 = sphi 0, %s50
      %s53 = sphi 0, %s52
      %s67 = sphi 0, %s53
      %s71 = sphi 0, %s71
      %s73 = sphi 0, %s71
      %s74 = sphi 0, %s73
      %s88 = sphi 0, %s74
      %s94 = sphi 0, %s96
      %s97 = sphi 0, %s94
      %s98 = sphi 0, %s97
      %s114 = sphi 0, %s98
    $region4: #{tpu_custom_call.1} parent=1 // loop_header_branch
      %19 = sbr.rel (%p17) target = $region8
    $region5: #{tpu_custom_call.1} parent=1 // loop_body
      %s21 = ssub.s32 %s16, 1
      %s22 = ssub.s32 %s16, 2
      %s23 = sadd.s32 %s16, 1
      %s24 = ssub.s32 %s16, %s23
      %p25 = scmp.eq.s32.totalorder %s24, 0
      %s27 = sadd.s32 %s26, 1
      %s28 = scalar_select %p25, %s26, %s27
      %p31 = pneg %p25
      %p32 = scmp.eq.s32.totalorder %s16, 1
      %p33 = por %p31, %p32
      %p34 = scmp.ne.s32.totalorder %s26, %s29
      %p35 = scmp.eq.s32.totalorder %s16, 0
      %p36 = por %p34, %p35
      %p37 = scmp.ne.s32.totalorder %s26, %s29
      %p38 = scmp.eq.s32.totalorder %s21, 1
      %p39 = por %p37, %p38
      %p40 = scmp.ne.s32.totalorder %s29, %s30
      %p41 = scmp.eq.s32.totalorder %s21, 0
      %p42 = por %p40, %p41
      %p43 = scmp.ne.s32.totalorder %s29, %s30
      %p44 = scmp.eq.s32.totalorder %s22, 1
      %p45 = por %p43, %p44
      %p47 = scmp.ne.s32.totalorder %s30, %s46
      %p48 = scmp.eq.s32.totalorder %s22, 0
      %p49 = por %p47, %p48
      %s51 = sadd.s32 %s50, 1
      %p54 = scmp.eq.s32.totalorder %s16, 1
      %p55 = scmp.ne.s32.totalorder %s50, %s52
      %p56 = scmp.eq.s32.totalorder %s16, 0
      %p57 = por %p55, %p56
      %p58 = scmp.ne.s32.totalorder %s50, %s52
      %p59 = scmp.eq.s32.totalorder %s21, 1
      %p60 = por %p58, %p59
      %p61 = scmp.ne.s32.totalorder %s52, %s53
      %p62 = scmp.eq.s32.totalorder %s21, 0
      %p63 = por %p61, %p62
      %p64 = scmp.ne.s32.totalorder %s52, %s53
      %p65 = scmp.eq.s32.totalorder %s22, 1
      %p66 = por %p64, %p65
      %p68 = scmp.ne.s32.totalorder %s53, %s67
      %p69 = scmp.eq.s32.totalorder %s22, 0
      %p70 = por %p68, %p69
      %s72 = sadd.s32 %s71, 1
      %p75 = scmp.eq.s32.totalorder %s16, 1
      %p76 = scmp.ne.s32.totalorder %s71, %s73
      %p77 = scmp.eq.s32.totalorder %s16, 0
      %p78 = por %p76, %p77
      %p79 = scmp.ne.s32.totalorder %s71, %s73
      %p80 = scmp.eq.s32.totalorder %s21, 1
      %p81 = por %p79, %p80
      %p82 = scmp.ne.s32.totalorder %s73, %s74
      %p83 = scmp.eq.s32.totalorder %s21, 0
      %p84 = por %p82, %p83
      %p85 = scmp.ne.s32.totalorder %s73, %s74
      %p86 = scmp.eq.s32.totalorder %s22, 1
      %p87 = por %p85, %p86
      %p89 = scmp.ne.s32.totalorder %s74, %s88
      %p90 = scmp.eq.s32.totalorder %s22, 0
      %p91 = por %p89, %p90
      %s92 = ssub.s32 %s16, %s23
      %p93 = scmp.eq.s32.totalorder %s92, 0
      %s95 = sadd.s32 %s94, 1
      %s96 = scalar_select %p93, %s94, %s95
      %p99 = pneg %p93
      %p100 = scmp.eq.s32.totalorder %s16, 1
      %p101 = por %p99, %p100
      %p102 = scmp.ne.s32.totalorder %s94, %s97
      %p103 = scmp.eq.s32.totalorder %s16, 0
      %p104 = por %p102, %p103
      %p105 = scmp.ne.s32.totalorder %s94, %s97
      %p106 = scmp.eq.s32.totalorder %s21, 1
      %p107 = por %p105, %p106
      %p108 = scmp.ne.s32.totalorder %s97, %s98
      %p109 = scmp.eq.s32.totalorder %s21, 0
      %p110 = por %p108, %p109
      %p111 = scmp.ne.s32.totalorder %s97, %s98
      %p112 = scmp.eq.s32.totalorder %s22, 1
      %p113 = por %p111, %p112
      %p115 = scmp.ne.s32.totalorder %s98, %s114
      %p116 = scmp.eq.s32.totalorder %s22, 0
      %p117 = por %p115, %p116
      %p118 = scmp.le.s32.totalorder 1, %s16
      %p119 = scmp.lt.s32.totalorder %s16, 3
      %p120 = pnand %p118, %p119
      %p121 = pneg %p120
      // Predicated region
      $region9: #{tpu_custom_call.1} parent=5 // pred_check
        _
      $region10: #{tpu_custom_call.1} parent=5 // pred_check_branch
        %123 = sbr.rel (%p120) target = $region12
      $region11: #{tpu_custom_call.1} parent=5 // pred_region
        %s124 = ssub.s32 %s16, 1
        // Predicated region
        $region13: #{tpu_custom_call.1} parent=11 // pred_check
          %p125 = pneg %p63
        $region14: #{tpu_custom_call.1} parent=11 // pred_check_branch
          %127 = sbr.rel (%p125) target = $region16
        $region15: #{tpu_custom_call.1} parent=11 // pred_region
          %s129 = ssub.s32 1536, 1536
          %130 = vsyncadd [#allocation8], %s129
          %s131 = sshll.u32 [#allocation7], 4
          %s132 = int_to_ptr.vmem [resolvable:$true] %s131
          %137 = dma.hbm_to_vmem [thread:$0]  %s1, 1536, %s132, [#allocation8], 384, 384, 24
        $region16: #{tpu_custom_call.1} parent=11 // pred_fallthru
          _
        // Predicated region
        $region17: #{tpu_custom_call.1} parent=11 // pred_check
          %p138 = pneg %p84
        $region18: #{tpu_custom_call.1} parent=11 // pred_check_branch
          %140 = sbr.rel (%p138) target = $region20
        $region19: #{tpu_custom_call.1} parent=11 // pred_region
          %s142 = ssub.s32 4096, 4096
          %143 = vsyncadd [#allocation8], %s142
          %s144 = sshll.u32 [#allocation9], 4
          %s145 = int_to_ptr.vmem [resolvable:$true] %s144
          %150 = dma.hbm_to_vmem [thread:$0]  %s2, 4096, %s145, [#allocation8], 128, 128, 8
        $region20: #{tpu_custom_call.1} parent=11 // pred_fallthru
          _
      $region12: #{tpu_custom_call.1} parent=5 // pred_fallthru
        _
      %p151 = scmp.lt.s32.totalorder %s16, 2
      // Predicated region
      $region21: #{tpu_custom_call.1} parent=5 // pred_check
        %p152 = pneg %p151
      $region22: #{tpu_custom_call.1} parent=5 // pred_check_branch
        %154 = sbr.rel (%p152) target = $region24
      $region23: #{tpu_custom_call.1} parent=5 // pred_region
        // Predicated region
        $region25: #{tpu_custom_call.1} parent=23 // pred_check
          %p155 = pneg %p36
        $region26: #{tpu_custom_call.1} parent=23 // pred_check_branch
          %157 = sbr.rel (%p155) target = $region28
        $region27: #{tpu_custom_call.1} parent=23 // pred_region
          %s158 = sand.u32 %s26, 1
          %s159 = scalar_lea.sflag [#allocation5], %s158
          %s160 = sand.u32 %s26, 1
          %s161 = smul.addr %s160, 8
          %s162 = scalar_lea.vmem [#allocation4], %s161
          %s164 = ssub.s32 128, 128
          %165 = vsyncadd %s159, %s164
          %s166 = smul.addr %s16, 128
          %s167 = scalar_lea.hbm %s0, %s166
          %s169 = sshll.u32 %s162, 4
          %s170 = int_to_ptr.vmem [resolvable:$true] %s169
          %172 = dma.hbm_to_vmem [thread:$0]  %s167, 128, %s170, %s159
        $region28: #{tpu_custom_call.1} parent=23 // pred_fallthru
          _
      $region24: #{tpu_custom_call.1} parent=5 // pred_fallthru
        _
      %p173 = scmp.le.s32.totalorder 1, %s16
      %p174 = scmp.lt.s32.totalorder %s16, 3
      %p175 = pnand %p173, %p174
      %p176 = pneg %p175
      // Predicated region
      $region29: #{tpu_custom_call.1} parent=5 // pred_check
        _
      $region30: #{tpu_custom_call.1} parent=5 // pred_check_branch
        %178 = sbr.rel (%p175) target = $region32
      $region31: #{tpu_custom_call.1} parent=5 // pred_region
        %s179 = ssub.s32 %s16, 1
        %s180 = sand.u32 %s29, 1
        %s181 = scalar_lea.sflag [#allocation5], %s180
        %s182 = sand.u32 %s29, 1
        %s183 = smul.addr %s182, 8
        %s184 = scalar_lea.vmem [#allocation4], %s183
        // Predicated region
        $region33: #{tpu_custom_call.1} parent=31 // pred_check
          %p185 = pneg %p42
        $region34: #{tpu_custom_call.1} parent=31 // pred_check_branch
          %187 = sbr.rel (%p185) target = $region36
        $region35: #{tpu_custom_call.1} parent=31 // pred_region
          %188 = dma.done %s181, 128
        $region36: #{tpu_custom_call.1} parent=31 // pred_fallthru
          _
        // Predicated region
        $region37: #{tpu_custom_call.1} parent=31 // pred_check
          %p189 = pneg %p63
        $region38: #{tpu_custom_call.1} parent=31 // pred_check_branch
          %191 = sbr.rel (%p189) target = $region40
        $region39: #{tpu_custom_call.1} parent=31 // pred_region
          %192 = dma.done [#allocation8], 1536
        $region40: #{tpu_custom_call.1} parent=31 // pred_fallthru
          _
        // Predicated region
        $region41: #{tpu_custom_call.1} parent=31 // pred_check
          %p193 = pneg %p84
        $region42: #{tpu_custom_call.1} parent=31 // pred_check_branch
          %195 = sbr.rel (%p193) target = $region44
        $region43: #{tpu_custom_call.1} parent=31 // pred_region
          %196 = dma.done [#allocation8], 4096
        $region44: #{tpu_custom_call.1} parent=31 // pred_fallthru
          _
        %s197 = sand.u32 %s29, 1
        %s198 = scalar_lea.sflag [#allocation5], %s197
        %s199 = sand.u32 %s29, 1
        %s200 = smul.addr %s199, 8
        %s201 = scalar_lea.vmem [#allocation4], %s200
        %p202 = pneg %p42
        %p203 = pneg %p39
        %p204 = pneg %p63
        %p205 = pneg %p60
        %p206 = pneg %p84
        %p207 = pneg %p81
        %p208 = pneg %p110
        %p209 = pneg %p107
        %s210 = sand.u32 %s97, 1
        %s211 = scalar_lea.sflag [#allocation6], %s210
        %s212 = sand.u32 %s97, 1
        %s213 = smul.addr %s212, 16
        %s214 = scalar_lea.vmem [#allocation10], %s213
        %v216 = vld [vmem:[%s184] sm:$0xff]
        %v217 = vpack.c.bf16 %v216, %v216
        %v218 = vld [vmem:[#allocation7] sm:$0xff]
        %v219 = vld [vmem:[#allocation7 + $0x8] sm:$0xff]
        %v220 = vld [vmem:[#allocation7 + $0x10] sm:$0xff]
        %v221 = vld [vmem:[#allocation7 + $0x18] sm:$0xff]
        %v222 = vld [vmem:[#allocation7 + $0x20] sm:$0xff]
        %v223 = vld [vmem:[#allocation7 + $0x28] sm:$0xff]
        %v224 = vld [vmem:[#allocation7 + $0x30] sm:$0xff]
        %v225 = vld [vmem:[#allocation7 + $0x38] sm:$0xff]
        %v226 = vld [vmem:[#allocation7 + $0x40] sm:$0xff]
        %v227 = vld [vmem:[#allocation7 + $0x48] sm:$0xff]
        %v228 = vld [vmem:[#allocation7 + $0x50] sm:$0xff]
        %v229 = vld [vmem:[#allocation7 + $0x58] sm:$0xff]
        %v242 = vunpack.c.l.b16 %v218
        %v243 = vunpack.c.h.b16 %v218
        %v244 = vunpack.c.l.b16 %v219
        %v245 = vunpack.c.h.b16 %v219
        %v246 = vunpack.c.l.b16 %v220
        %v247 = vunpack.c.h.b16 %v220
        %v248 = vunpack.c.l.b16 %v221
        %v249 = vunpack.c.h.b16 %v221
        %v250 = vunpack.c.l.b16 %v222
        %v251 = vunpack.c.h.b16 %v222
        %v252 = vunpack.c.l.b16 %v223
        %v253 = vunpack.c.h.b16 %v223
        %v254 = vunpack.c.l.b16 %v224
        %v255 = vunpack.c.h.b16 %v224
        %v256 = vunpack.c.l.b16 %v225
        %v257 = vunpack.c.h.b16 %v225
        %v258 = vunpack.c.l.b16 %v226
        %v259 = vunpack.c.h.b16 %v226
        %v260 = vunpack.c.l.b16 %v227
        %v261 = vunpack.c.h.b16 %v227
        %v262 = vunpack.c.l.b16 %v228
        %v263 = vunpack.c.h.b16 %v228
        %v264 = vunpack.c.l.b16 %v229
        %v265 = vunpack.c.h.b16 %v229
        %v266 = vpack.c.b16 %v248, %v242
        %v267 = vpack.c.b16 %v249, %v243
        %v268 = vpack.c.b16 %v250, %v244
        %v269 = vpack.c.b16 %v251, %v245
        %v270 = vpack.c.b16 %v252, %v246
        %v271 = vpack.c.b16 %v253, %v247
        %v272 = vpack.c.b16 %v260, %v254
        %v273 = vpack.c.b16 %v261, %v255
        %v274 = vpack.c.b16 %v262, %v256
        %v275 = vpack.c.b16 %v263, %v257
        %v276 = vpack.c.b16 %v264, %v258
        %v277 = vpack.c.b16 %v265, %v259
        %vm290 = vcmask 261120
        %v292 = vsel %vm290, %v217, 0
        %294 = vmatprep.subr.bf16.mxu0 %v267
        %295 = vmatpush1.bf16.msra.mxu0 %v266
        %296 = vmatprep.subr.bf16.mxu0 %v273
        %297 = vmatpush1.bf16.msra.mxu0 %v272
        %298 = vmatprep.subr.bf16.mxu0 0
        %299 = vmatpush1.bf16.msra.mxu0 0
        %300 = vmatprep.subr.bf16.mxu0 0
        %301 = vmatpush1.bf16.msra.mxu0 0
        %302 = vmatprep.subr.bf16.mxu0 0
        %303 = vmatpush1.bf16.msra.mxu0 0
        %304 = vmatprep.subr.bf16.mxu0 0
        %305 = vmatpush1.bf16.msra.mxu0 0
        %306 = vmatprep.subr.bf16.mxu0 0
        %307 = vmatpush1.bf16.msra.mxu0 0
        %308 = vmatprep.subr.bf16.mxu0 0
        %309 = vmatpush1.bf16.msra.mxu0 0
        %310 = vmatprep.subr.bf16.mxu0 0
        %311 = vmatpush1.bf16.msra.mxu0 0
        %312 = vmatprep.subr.bf16.mxu0 0
        %313 = vmatpush1.bf16.msra.mxu0 0
        %314 = vmatprep.subr.bf16.mxu0 0
        %315 = vmatpush1.bf16.msra.mxu0 0
        %316 = vmatprep.subr.bf16.mxu0 0
        %317 = vmatpush1.bf16.msra.mxu0 0
        %318 = vmatprep.subr.bf16.mxu0 0
        %319 = vmatpush1.bf16.msra.mxu0 0
        %320 = vmatprep.subr.bf16.mxu0 0
        %321 = vmatpush1.bf16.msra.mxu0 0
        %322 = vmatprep.subr.bf16.mxu0 0
        %323 = vmatpush1.bf16.msra.mxu0 0
        %324 = vmatprep.subr.bf16.mxu0 0
        %325 = vmatpush1.bf16.msra.mxu0 0
        %326 = vmatprep.mubr.bf16.mxu0 0
        %327 = vmatmul.mubr.bf16.gmra.mrb[0].mxu0 %v292
        %v328 = vpop.f32.mrb[0].mxu0
        %v329 = vadd.f32 0.0, %v328
        %v330 = vpop.f32.mrb[0].mxu0
        %v331 = vadd.f32 0.0, %v330
        %v332 = vpop.f32.mrb[0].mxu0
        %v333 = vpop.f32.mrb[0].mxu0
        %334 = vdwg.mxu0
        %335 = vmatprep.subr.bf16.mxu0 %v269
        %336 = vmatpush1.bf16.msra.mxu0 %v268
        %337 = vmatprep.subr.bf16.mxu0 %v275
        %338 = vmatpush1.bf16.msra.mxu0 %v274
        %339 = vmatprep.subr.bf16.mxu0 0
        %340 = vmatpush1.bf16.msra.mxu0 0
        %341 = vmatprep.subr.bf16.mxu0 0
        %342 = vmatpush1.bf16.msra.mxu0 0
        %343 = vmatprep.subr.bf16.mxu0 0
        %344 = vmatpush1.bf16.msra.mxu0 0
        %345 = vmatprep.subr.bf16.mxu0 0
        %346 = vmatpush1.bf16.msra.mxu0 0
        %347 = vmatprep.subr.bf16.mxu0 0
        %348 = vmatpush1.bf16.msra.mxu0 0
        %349 = vmatprep.subr.bf16.mxu0 0
        %350 = vmatpush1.bf16.msra.mxu0 0
        %351 = vmatprep.subr.bf16.mxu0 0
        %352 = vmatpush1.bf16.msra.mxu0 0
        %353 = vmatprep.subr.bf16.mxu0 0
        %354 = vmatpush1.bf16.msra.mxu0 0
        %355 = vmatprep.subr.bf16.mxu0 0
        %356 = vmatpush1.bf16.msra.mxu0 0
        %357 = vmatprep.subr.bf16.mxu0 0
        %358 = vmatpush1.bf16.msra.mxu0 0
        %359 = vmatprep.subr.bf16.mxu0 0
        %360 = vmatpush1.bf16.msra.mxu0 0
        %361 = vmatprep.subr.bf16.mxu0 0
        %362 = vmatpush1.bf16.msra.mxu0 0
        %363 = vmatprep.subr.bf16.mxu0 0
        %364 = vmatpush1.bf16.msra.mxu0 0
        %365 = vmatprep.subr.bf16.mxu0 0
        %366 = vmatpush1.bf16.msra.mxu0 0
        %367 = vmatprep.mubr.bf16.mxu0 0
        %368 = vmatmul.mubr.bf16.gmra.mrb[0].mxu0 %v292
        %v369 = vpop.f32.mrb[0].mxu0
        %v370 = vadd.f32 0.0, %v369
        %v371 = vpop.f32.mrb[0].mxu0
        %v372 = vadd.f32 0.0, %v371
        %v373 = vpop.f32.mrb[0].mxu0
        %v374 = vpop.f32.mrb[0].mxu0
        %375 = vdwg.mxu0
        %376 = vmatprep.subr.bf16.mxu0 %v271
        %377 = vmatpush1.bf16.msra.mxu0 %v270
        %378 = vmatprep.subr.bf16.mxu0 %v277
        %379 = vmatpush1.bf16.msra.mxu0 %v276
        %380 = vmatprep.subr.bf16.mxu0 0
        %381 = vmatpush1.bf16.msra.mxu0 0
        %382 = vmatprep.subr.bf16.mxu0 0
        %383 = vmatpush1.bf16.msra.mxu0 0
        %384 = vmatprep.subr.bf16.mxu0 0
        %385 = vmatpush1.bf16.msra.mxu0 0
        %386 = vmatprep.subr.bf16.mxu0 0
        %387 = vmatpush1.bf16.msra.mxu0 0
        %388 = vmatprep.subr.bf16.mxu0 0
        %389 = vmatpush1.bf16.msra.mxu0 0
        %390 = vmatprep.subr.bf16.mxu0 0
        %391 = vmatpush1.bf16.msra.mxu0 0
        %392 = vmatprep.subr.bf16.mxu0 0
        %393 = vmatpush1.bf16.msra.mxu0 0
        %394 = vmatprep.subr.bf16.mxu0 0
        %395 = vmatpush1.bf16.msra.mxu0 0
        %396 = vmatprep.subr.bf16.mxu0 0
        %397 = vmatpush1.bf16.msra.mxu0 0
        %398 = vmatprep.subr.bf16.mxu0 0
        %399 = vmatpush1.bf16.msra.mxu0 0
        %400 = vmatprep.subr.bf16.mxu0 0
        %401 = vmatpush1.bf16.msra.mxu0 0
        %402 = vmatprep.subr.bf16.mxu0 0
        %403 = vmatpush1.bf16.msra.mxu0 0
        %404 = vmatprep.subr.bf16.mxu0 0
        %405 = vmatpush1.bf16.msra.mxu0 0
        %406 = vmatprep.subr.bf16.mxu0 0
        %407 = vmatpush1.bf16.msra.mxu0 0
        %408 = vmatprep.mubr.bf16.mxu0 0
        %409 = vmatmul.mubr.bf16.gmra.mrb[0].mxu0 %v292
        %v410 = vpop.f32.mrb[0].mxu0
        %v411 = vadd.f32 0.0, %v410
        %v412 = vpop.f32.mrb[0].mxu0
        %v413 = vadd.f32 0.0, %v412
        %v414 = vpop.f32.mrb[0].mxu0
        %v415 = vpop.f32.mrb[0].mxu0
        %416 = vdwg.mxu0
        %v417 = vpack.c.bf16 %v329, %v329
        %v418 = vpack.c.bf16 %v331, %v331
        %v419 = vpack.c.bf16 %v370, %v370
        %v420 = vpack.c.bf16 %v372, %v372
        %v421 = vpack.c.bf16 %v411, %v411
        %v422 = vpack.c.bf16 %v413, %v413
        %v429 = vunpack.c.l.b16 %v417
        %v430 = vunpack.c.l.b16 %v418
        %v431 = vunpack.c.l.b16 %v419
        %v432 = vunpack.c.l.b16 %v420
        %v433 = vunpack.c.l.b16 %v421
        %v434 = vunpack.c.l.b16 %v422
        %v435 = vpack.c.b16 %v430, %v429
        %v436 = vpack.c.b16 %v432, %v431
        %v437 = vpack.c.b16 %v434, %v433
        %441 = vst [vmem:[#allocation2] sm:$0xff] %v435
        %442 = vst [vmem:[#allocation2 + $0x8] sm:$0xff] %v436
        %443 = vst [vmem:[#allocation2 + $0x10] sm:$0xff] %v437
        %v444 = vld [vmem:[#allocation2] sm:$0xf]
        %v445 = vld [vmem:[#allocation2 + $0x8] sm:$0xf]
        %v446 = vld [vmem:[#allocation2 + $0x10] sm:$0xf]
        %447 = vmatprep.subr.bf16.mxu0 0
        %448 = vmatpush1.bf16.xpose.msra.mxu0 %v445
        %449 = vmatprep.subr.bf16.mxu0 0
        %450 = vmatpush1.bf16.xpose.msra.mxu0 0
        %451 = vmatprep.subr.bf16.mxu0 0
        %452 = vmatpush1.bf16.xpose.msra.mxu0 0
        %453 = vmatprep.subr.bf16.mxu0 0
        %454 = vmatpush1.bf16.xpose.msra.mxu0 0
        %455 = vmatprep.subr.bf16.mxu0 0
        %456 = vmatpush1.bf16.xpose.msra.mxu0 0
        %457 = vmatprep.subr.bf16.mxu0 0
        %458 = vmatpush1.bf16.xpose.msra.mxu0 0
        %459 = vmatprep.subr.bf16.mxu0 0
        %460 = vmatpush1.bf16.xpose.msra.mxu0 0
        %461 = vmatprep.subr.bf16.mxu0 0
        %462 = vmatpush1.bf16.xpose.msra.mxu0 0
        %463 = vmatprep.subr.bf16.mxu0 0
        %464 = vmatpush1.bf16.xpose.msra.mxu0 0
        %465 = vmatprep.subr.bf16.mxu0 0
        %466 = vmatpush1.bf16.xpose.msra.mxu0 0
        %467 = vmatprep.subr.bf16.mxu0 0
        %468 = vmatpush1.bf16.xpose.msra.mxu0 0
        %469 = vmatprep.subr.bf16.mxu0 0
        %470 = vmatpush1.bf16.xpose.msra.mxu0 0
        %471 = vmatprep.subr.bf16.mxu0 0
        %472 = vmatpush1.bf16.xpose.msra.mxu0 0
        %473 = vmatprep.subr.bf16.mxu0 0
        %474 = vmatpush1.bf16.xpose.msra.mxu0 0
        %475 = vmatprep.subr.bf16.mxu0 0
        %476 = vmatpush1.bf16.xpose.msra.mxu0 0
        %477 = vmatprep.subr.bf16.mxu0 0
        %478 = vmatpush1.bf16.xpose.msra.mxu0 0
        %479 = vmatprep.mubr.bf16.mxu0 0
        %480 = vmatmul.mubr.bf16.gmra.mrb[0].mxu0 %v444
        %v481 = vpop.f32.mrb[0].mxu0
        %v482 = vadd.f32 0.0, %v481
        %v483 = vpop.f32.mrb[0].mxu0
        %v484 = vpop.f32.mrb[0].mxu0
        %v485 = vpop.f32.mrb[0].mxu0
        %486 = vdwg.mxu0
        %vm487 = vcmask 64512
        %v488 = vsel %vm487, %v482, -inf
        %489 = vmax.xlane.f32.xlu0 %v488
        %v490 = vpop.xlane.xlu0 %489
        %v491 = vsub.f32 %v482, %v490
        %v492 = vmul.f32 %v491, 1.442695
        %v493 = vpow.pop %v492
        %v494 = vsel %vm487, %v493, 0.0
        %495 = vadd.xlane.f32.xlu0 %v494
        %v496 = vpop.xlane.xlu0 %495
        %v497 = vpack.c.bf16 %v493, %v493
        %v499 = vsel %vm487, %v497, 0
        %vm501 = vcmask 1043456
        %v503 = vsel %vm501, %v446, 0
        %505 = vmatprep.subr.bf16.mxu0 0
        %506 = vmatpush1.bf16.msra.mxu0 %v503
        %507 = vmatprep.subr.bf16.mxu0 0
        %508 = vmatpush1.bf16.msra.mxu0 0
        %509 = vmatprep.subr.bf16.mxu0 0
        %510 = vmatpush1.bf16.msra.mxu0 0
        %511 = vmatprep.subr.bf16.mxu0 0
        %512 = vmatpush1.bf16.msra.mxu0 0
        %513 = vmatprep.subr.bf16.mxu0 0
        %514 = vmatpush1.bf16.msra.mxu0 0
        %515 = vmatprep.subr.bf16.mxu0 0
        %516 = vmatpush1.bf16.msra.mxu0 0
        %517 = vmatprep.subr.bf16.mxu0 0
        %518 = vmatpush1.bf16.msra.mxu0 0
        %519 = vmatprep.subr.bf16.mxu0 0
        %520 = vmatpush1.bf16.msra.mxu0 0
        %521 = vmatprep.subr.bf16.mxu0 0
        %522 = vmatpush1.bf16.msra.mxu0 0
        %523 = vmatprep.subr.bf16.mxu0 0
        %524 = vmatpush1.bf16.msra.mxu0 0
        %525 = vmatprep.subr.bf16.mxu0 0
        %526 = vmatpush1.bf16.msra.mxu0 0
        %527 = vmatprep.subr.bf16.mxu0 0
        %528 = vmatpush1.bf16.msra.mxu0 0
        %529 = vmatprep.subr.bf16.mxu0 0
        %530 = vmatpush1.bf16.msra.mxu0 0
        %531 = vmatprep.subr.bf16.mxu0 0
        %532 = vmatpush1.bf16.msra.mxu0 0
        %533 = vmatprep.subr.bf16.mxu0 0
        %534 = vmatpush1.bf16.msra.mxu0 0
        %535 = vmatprep.subr.bf16.mxu0 0
        %536 = vmatpush1.bf16.msra.mxu0 0
        %537 = vmatprep.mubr.bf16.mxu0 0
        %538 = vmatmul.mubr.bf16.gmra.mrb[0].mxu0 %v499
        %v539 = vpop.f32.mrb[0].mxu0
        %v540 = vadd.f32 0.0, %v539
        %v541 = vpop.f32.mrb[0].mxu0
        %v542 = vpop.f32.mrb[0].mxu0
        %v543 = vpop.f32.mrb[0].mxu0
        %544 = vdwg.mxu0
        %v545 = vrcp.pop %v496
        %v546 = vmul.f32 %v540, %v545
        %v547 = vpack.c.bf16 %v546, %v546
        %548 = vst [vmem:[#allocation3] sm:$0xf] %v547
        %v549 = vld [vmem:[#allocation2 + $0x4] sm:$0xf]
        %v550 = vld [vmem:[#allocation2 + $0xc] sm:$0xf]
        %v551 = vld [vmem:[#allocation2 + $0x14] sm:$0xf]
        %552 = vmatprep.subr.bf16.mxu0 0
        %553 = vmatpush1.bf16.xpose.msra.mxu0 %v550
        %554 = vmatprep.subr.bf16.mxu0 0
        %555 = vmatpush1.bf16.xpose.msra.mxu0 0
        %556 = vmatprep.subr.bf16.mxu0 0
        %557 = vmatpush1.bf16.xpose.msra.mxu0 0
        %558 = vmatprep.subr.bf16.mxu0 0
        %559 = vmatpush1.bf16.xpose.msra.mxu0 0
        %560 = vmatprep.subr.bf16.mxu0 0
        %561 = vmatpush1.bf16.xpose.msra.mxu0 0
        %562 = vmatprep.subr.bf16.mxu0 0
        %563 = vmatpush1.bf16.xpose.msra.mxu0 0
        %564 = vmatprep.subr.bf16.mxu0 0
        %565 = vmatpush1.bf16.xpose.msra.mxu0 0
        %566 = vmatprep.subr.bf16.mxu0 0
        %567 = vmatpush1.bf16.xpose.msra.mxu0 0
        %568 = vmatprep.subr.bf16.mxu0 0
        %569 = vmatpush1.bf16.xpose.msra.mxu0 0
        %570 = vmatprep.subr.bf16.mxu0 0
        %571 = vmatpush1.bf16.xpose.msra.mxu0 0
        %572 = vmatprep.subr.bf16.mxu0 0
        %573 = vmatpush1.bf16.xpose.msra.mxu0 0
        %574 = vmatprep.subr.bf16.mxu0 0
        %575 = vmatpush1.bf16.xpose.msra.mxu0 0
        %576 = vmatprep.subr.bf16.mxu0 0
        %577 = vmatpush1.bf16.xpose.msra.mxu0 0
        %578 = vmatprep.subr.bf16.mxu0 0
        %579 = vmatpush1.bf16.xpose.msra.mxu0 0
        %580 = vmatprep.subr.bf16.mxu0 0
        %581 = vmatpush1.bf16.xpose.msra.mxu0 0
        %582 = vmatprep.subr.bf16.mxu0 0
        %583 = vmatpush1.bf16.xpose.msra.mxu0 0
        %584 = vmatprep.mubr.bf16.mxu0 0
        %585 = vmatmul.mubr.bf16.gmra.mrb[0].mxu0 %v549
        %v586 = vpop.f32.mrb[0].mxu0
        %v587 = vadd.f32 0.0, %v586
        %v588 = vpop.f32.mrb[0].mxu0
        %v589 = vpop.f32.mrb[0].mxu0
        %v590 = vpop.f32.mrb[0].mxu0
        %591 = vdwg.mxu0
        %v592 = vsel %vm487, %v587, -inf
        %593 = vmax.xlane.f32.xlu0 %v592
        %v594 = vpop.xlane.xlu0 %593
        %v595 = vsub.f32 %v587, %v594
        %v596 = vmul.f32 %v595, 1.442695
        %v597 = vpow.pop %v596
        %v598 = vsel %vm487, %v597, 0.0
        %599 = vadd.xlane.f32.xlu0 %v598
        %v600 = vpop.xlane.xlu0 %599
        %v601 = vpack.c.bf16 %v597, %v597
        %v603 = vsel %vm487, %v601, 0
        %v606 = vsel %vm501, %v551, 0
        %608 = vmatprep.subr.bf16.mxu0 0
        %609 = vmatpush1.bf16.msra.mxu0 %v606
        %610 = vmatprep.subr.bf16.mxu0 0
        %611 = vmatpush1.bf16.msra.mxu0 0
        %612 = vmatprep.subr.bf16.mxu0 0
        %613 = vmatpush1.bf16.msra.mxu0 0
        %614 = vmatprep.subr.bf16.mxu0 0
        %615 = vmatpush1.bf16.msra.mxu0 0
        %616 = vmatprep.subr.bf16.mxu0 0
        %617 = vmatpush1.bf16.msra.mxu0 0
        %618 = vmatprep.subr.bf16.mxu0 0
        %619 = vmatpush1.bf16.msra.mxu0 0
        %620 = vmatprep.subr.bf16.mxu0 0
        %621 = vmatpush1.bf16.msra.mxu0 0
        %622 = vmatprep.subr.bf16.mxu0 0
        %623 = vmatpush1.bf16.msra.mxu0 0
        %624 = vmatprep.subr.bf16.mxu0 0
        %625 = vmatpush1.bf16.msra.mxu0 0
        %626 = vmatprep.subr.bf16.mxu0 0
        %627 = vmatpush1.bf16.msra.mxu0 0
        %628 = vmatprep.subr.bf16.mxu0 0
        %629 = vmatpush1.bf16.msra.mxu0 0
        %630 = vmatprep.subr.bf16.mxu0 0
        %631 = vmatpush1.bf16.msra.mxu0 0
        %632 = vmatprep.subr.bf16.mxu0 0
        %633 = vmatpush1.bf16.msra.mxu0 0
        %634 = vmatprep.subr.bf16.mxu0 0
        %635 = vmatpush1.bf16.msra.mxu0 0
        %636 = vmatprep.subr.bf16.mxu0 0
        %637 = vmatpush1.bf16.msra.mxu0 0
        %638 = vmatprep.subr.bf16.mxu0 0
        %639 = vmatpush1.bf16.msra.mxu0 0
        %640 = vmatprep.mubr.bf16.mxu0 0
        %641 = vmatmul.mubr.bf16.gmra.mrb[0].mxu0 %v603
        %v642 = vpop.f32.mrb[0].mxu0
        %v643 = vadd.f32 0.0, %v642
        %v644 = vpop.f32.mrb[0].mxu0
        %v645 = vpop.f32.mrb[0].mxu0
        %v646 = vpop.f32.mrb[0].mxu0
        %647 = vdwg.mxu0
        %v648 = vrcp.pop %v600
        %v649 = vmul.f32 %v643, %v648
        %v650 = vpack.c.bf16 %v649, %v649
        %651 = vst [vmem:[#allocation3 + $0x4] sm:$0xf] %v650
        %v652 = vld [vmem:[#allocation3] sm:$0xff]
        %v653 = vld [vmem:[#allocation9] sm:$0xff]
        %v654 = vld [vmem:[#allocation9 + $0x8] sm:$0xff]
        %v655 = vld [vmem:[#allocation9 + $0x10] sm:$0xff]
        %v656 = vld [vmem:[#allocation9 + $0x18] sm:$0xff]
        %v657 = vld [vmem:[#allocation9 + $0x20] sm:$0xff]
        %v658 = vld [vmem:[#allocation9 + $0x28] sm:$0xff]
        %v659 = vld [vmem:[#allocation9 + $0x30] sm:$0xff]
        %v660 = vld [vmem:[#allocation9 + $0x38] sm:$0xff]
        %v661 = vld [vmem:[#allocation9 + $0x40] sm:$0xff]
        %v662 = vld [vmem:[#allocation9 + $0x48] sm:$0xff]
        %v663 = vld [vmem:[#allocation9 + $0x50] sm:$0xff]
        %v664 = vld [vmem:[#allocation9 + $0x58] sm:$0xff]
        %v665 = vld [vmem:[#allocation9 + $0x60] sm:$0xff]
        %v666 = vld [vmem:[#allocation9 + $0x68] sm:$0xff]
        %v667 = vld [vmem:[#allocation9 + $0x70] sm:$0xff]
        %v668 = vld [vmem:[#allocation9 + $0x78] sm:$0xff]
        %v669 = vld [vmem:[#allocation9 + $0x80] sm:$0xff]
        %v670 = vld [vmem:[#allocation9 + $0x88] sm:$0xff]
        %v671 = vld [vmem:[#allocation9 + $0x90] sm:$0xff]
        %v672 = vld [vmem:[#allocation9 + $0x98] sm:$0xff]
        %v673 = vld [vmem:[#allocation9 + $0xa0] sm:$0xff]
        %v674 = vld [vmem:[#allocation9 + $0xa8] sm:$0xff]
        %v675 = vld [vmem:[#allocation9 + $0xb0] sm:$0xff]
        %v676 = vld [vmem:[#allocation9 + $0xb8] sm:$0xff]
        %v677 = vld [vmem:[#allocation9 + $0xc0] sm:$0xff]
        %v678 = vld [vmem:[#allocation9 + $0xc8] sm:$0xff]
        %v679 = vld [vmem:[#allocation9 + $0xd0] sm:$0xff]
        %v680 = vld [vmem:[#allocation9 + $0xd8] sm:$0xff]
        %v681 = vld [vmem:[#allocation9 + $0xe0] sm:$0xff]
        %v682 = vld [vmem:[#allocation9 + $0xe8] sm:$0xff]
        %v683 = vld [vmem:[#allocation9 + $0xf0] sm:$0xff]
        %v684 = vld [vmem:[#allocation9 + $0xf8] sm:$0xff]
        %v686 = vunpack.c.l.b16 %v652
        %v687 = vunpack.c.h.b16 %v652
        %v688 = vpack.c.b16 %v686, %v686
        %v689 = vpack.c.b16 %v687, %v687
        %v724 = vunpack.c.l.b16 %v653
        %v725 = vunpack.c.h.b16 %v653
        %v726 = vunpack.c.l.b16 %v654
        %v727 = vunpack.c.h.b16 %v654
        %v728 = vunpack.c.l.b16 %v655
        %v729 = vunpack.c.h.b16 %v655
        %v730 = vunpack.c.l.b16 %v656
        %v731 = vunpack.c.h.b16 %v656
        %v732 = vunpack.c.l.b16 %v657
        %v733 = vunpack.c.h.b16 %v657
        %v734 = vunpack.c.l.b16 %v658
        %v735 = vunpack.c.h.b16 %v658
        %v736 = vunpack.c.l.b16 %v659
        %v737 = vunpack.c.h.b16 %v659
        %v738 = vunpack.c.l.b16 %v660
        %v739 = vunpack.c.h.b16 %v660
        %v740 = vunpack.c.l.b16 %v661
        %v741 = vunpack.c.h.b16 %v661
        %v742 = vunpack.c.l.b16 %v662
        %v743 = vunpack.c.h.b16 %v662
        %v744 = vunpack.c.l.b16 %v663
        %v745 = vunpack.c.h.b16 %v663
        %v746 = vunpack.c.l.b16 %v664
        %v747 = vunpack.c.h.b16 %v664
        %v748 = vunpack.c.l.b16 %v665
        %v749 = vunpack.c.h.b16 %v665
        %v750 = vunpack.c.l.b16 %v666
        %v751 = vunpack.c.h.b16 %v666
        %v752 = vunpack.c.l.b16 %v667
        %v753 = vunpack.c.h.b16 %v667
        %v754 = vunpack.c.l.b16 %v668
        %v755 = vunpack.c.h.b16 %v668
        %v756 = vunpack.c.l.b16 %v669
        %v757 = vunpack.c.h.b16 %v669
        %v758 = vunpack.c.l.b16 %v670
        %v759 = vunpack.c.h.b16 %v670
        %v760 = vunpack.c.l.b16 %v671
        %v761 = vunpack.c.h.b16 %v671
        %v762 = vunpack.c.l.b16 %v672
        %v763 = vunpack.c.h.b16 %v672
        %v764 = vunpack.c.l.b16 %v673
        %v765 = vunpack.c.h.b16 %v673
        %v766 = vunpack.c.l.b16 %v674
        %v767 = vunpack.c.h.b16 %v674
        %v768 = vunpack.c.l.b16 %v675
        %v769 = vunpack.c.h.b16 %v675
        %v770 = vunpack.c.l.b16 %v676
        %v771 = vunpack.c.h.b16 %v676
        %v772 = vunpack.c.l.b16 %v677
        %v773 = vunpack.c.h.b16 %v677
        %v774 = vunpack.c.l.b16 %v678
        %v775 = vunpack.c.h.b16 %v678
        %v776 = vunpack.c.l.b16 %v679
        %v777 = vunpack.c.h.b16 %v679
        %v778 = vunpack.c.l.b16 %v680
        %v779 = vunpack.c.h.b16 %v680
        %v780 = vunpack.c.l.b16 %v681
        %v781 = vunpack.c.h.b16 %v681
        %v782 = vunpack.c.l.b16 %v682
        %v783 = vunpack.c.h.b16 %v682
        %v784 = vunpack.c.l.b16 %v683
        %v785 = vunpack.c.h.b16 %v683
        %v786 = vunpack.c.l.b16 %v684
        %v787 = vunpack.c.h.b16 %v684
        %v788 = vpack.c.b16 %v726, %v724
        %v789 = vpack.c.b16 %v727, %v725
        %v790 = vpack.c.b16 %v730, %v728
        %v791 = vpack.c.b16 %v731, %v729
        %v792 = vpack.c.b16 %v734, %v732
        %v793 = vpack.c.b16 %v735, %v733
        %v794 = vpack.c.b16 %v738, %v736
        %v795 = vpack.c.b16 %v739, %v737
        %v796 = vpack.c.b16 %v742, %v740
        %v797 = vpack.c.b16 %v743, %v741
        %v798 = vpack.c.b16 %v746, %v744
        %v799 = vpack.c.b16 %v747, %v745
        %v800 = vpack.c.b16 %v750, %v748
        %v801 = vpack.c.b16 %v751, %v749
        %v802 = vpack.c.b16 %v754, %v752
        %v803 = vpack.c.b16 %v755, %v753
        %v804 = vpack.c.b16 %v758, %v756
        %v805 = vpack.c.b16 %v759, %v757
        %v806 = vpack.c.b16 %v762, %v760
        %v807 = vpack.c.b16 %v763, %v761
        %v808 = vpack.c.b16 %v766, %v764
        %v809 = vpack.c.b16 %v767, %v765
        %v810 = vpack.c.b16 %v770, %v768
        %v811 = vpack.c.b16 %v771, %v769
        %v812 = vpack.c.b16 %v774, %v772
        %v813 = vpack.c.b16 %v775, %v773
        %v814 = vpack.c.b16 %v778, %v776
        %v815 = vpack.c.b16 %v779, %v777
        %v816 = vpack.c.b16 %v782, %v780
        %v817 = vpack.c.b16 %v783, %v781
        %v818 = vpack.c.b16 %v786, %v784
        %v819 = vpack.c.b16 %v787, %v785
        %852 = vmatprep.subr.bf16.mxu0 %v789
        %853 = vmatpush1.bf16.msra.mxu0 %v788
        %854 = vmatprep.subr.bf16.mxu0 %v791
        %855 = vmatpush1.bf16.msra.mxu0 %v790
        %856 = vmatprep.subr.bf16.mxu0 %v793
        %857 = vmatpush1.bf16.msra.mxu0 %v792
        %858 = vmatprep.subr.bf16.mxu0 %v795
        %859 = vmatpush1.bf16.msra.mxu0 %v794
        %860 = vmatprep.subr.bf16.mxu0 %v797
        %861 = vmatpush1.bf16.msra.mxu0 %v796
        %862 = vmatprep.subr.bf16.mxu0 %v799
        %863 = vmatpush1.bf16.msra.mxu0 %v798
        %864 = vmatprep.subr.bf16.mxu0 %v801
        %865 = vmatpush1.bf16.msra.mxu0 %v800
        %866 = vmatprep.subr.bf16.mxu0 %v803
        %867 = vmatpush1.bf16.msra.mxu0 %v802
        %868 = vmatprep.subr.bf16.mxu0 %v805
        %869 = vmatpush1.bf16.msra.mxu0 %v804
        %870 = vmatprep.subr.bf16.mxu0 %v807
        %871 = vmatpush1.bf16.msra.mxu0 %v806
        %872 = vmatprep.subr.bf16.mxu0 %v809
        %873 = vmatpush1.bf16.msra.mxu0 %v808
        %874 = vmatprep.subr.bf16.mxu0 %v811
        %875 = vmatpush1.bf16.msra.mxu0 %v810
        %876 = vmatprep.subr.bf16.mxu0 %v813
        %877 = vmatpush1.bf16.msra.mxu0 %v812
        %878 = vmatprep.subr.bf16.mxu0 %v815
        %879 = vmatpush1.bf16.msra.mxu0 %v814
        %880 = vmatprep.subr.bf16.mxu0 %v817
        %881 = vmatpush1.bf16.msra.mxu0 %v816
        %882 = vmatprep.subr.bf16.mxu0 %v819
        %883 = vmatpush1.bf16.msra.mxu0 %v818
        %884 = vmatprep.mubr.bf16.mxu0 %v689
        %885 = vmatmul.mubr.bf16.gmra.mrb[0].mxu0 %v688
        %v886 = vpop.f32.mrb[0].mxu0
        %v887 = vadd.f32 0.0, %v886
        %v888 = vpop.f32.mrb[0].mxu0
        %v889 = vadd.f32 0.0, %v888
        %v890 = vpop.f32.mrb[0].mxu0
        %v891 = vpop.f32.mrb[0].mxu0
        %892 = vdwg.mxu0
        %893 = vst [vmem:[%s214] sm:$0xff] %v887
        %894 = vst [vmem:[%s214 + $0x8] sm:$0xff] %v889
        %s895 = sand.u32 %s97, 1
        %s896 = scalar_lea.sflag [#allocation6], %s895
        %s897 = sand.u32 %s97, 1
        %s898 = smul.addr %s897, 16
        %s899 = scalar_lea.vmem [#allocation10], %s898
        // Predicated region
        $region45: #{tpu_custom_call.1} parent=31 // pred_check
          %p900 = pneg %p107
        $region46: #{tpu_custom_call.1} parent=31 // pred_check_branch
          %902 = sbr.rel (%p900) target = $region48
        $region47: #{tpu_custom_call.1} parent=31 // pred_region
          %s904 = ssub.s32 256, 256
          %905 = vsyncadd %s896, %s904
          %s906 = smul.addr %s21, 2
          %s907 = smul.addr %s906, 128
          %s908 = scalar_lea.hbm %s3, %s907
          %s910 = sshll.u32 %s899, 4
          %s911 = int_to_ptr.vmem [resolvable:$true] %s910
          %913 = dma.vmem_to_hbm [thread:$0]  %s911, 256, %s908, %s896
        $region48: #{tpu_custom_call.1} parent=31 // pred_fallthru
          _
      $region32: #{tpu_custom_call.1} parent=5 // pred_fallthru
        _
      %p914 = scmp.le.s32.totalorder 2, %s16
      // Predicated region
      $region49: #{tpu_custom_call.1} parent=5 // pred_check
        %p915 = pneg %p914
      $region50: #{tpu_custom_call.1} parent=5 // pred_check_branch
        %917 = sbr.rel (%p915) target = $region52
      $region51: #{tpu_custom_call.1} parent=5 // pred_region
        %s918 = ssub.s32 %s16, 2
        // Predicated region
        $region53: #{tpu_custom_call.1} parent=51 // pred_check
          %p919 = pneg %p113
        $region54: #{tpu_custom_call.1} parent=51 // pred_check_branch
          %921 = sbr.rel (%p919) target = $region56
        $region55: #{tpu_custom_call.1} parent=51 // pred_region
          %s922 = sand.u32 %s98, 1
          %s923 = scalar_lea.sflag [#allocation6], %s922
          %s924 = sand.u32 %s98, 1
          %s925 = smul.addr %s924, 16
          %s926 = scalar_lea.vmem [#allocation10], %s925
          %927 = dma.done %s923, 256
        $region56: #{tpu_custom_call.1} parent=51 // pred_fallthru
          _
      $region52: #{tpu_custom_call.1} parent=5 // pred_fallthru
        _
    $region6: #{tpu_custom_call.1} parent=1 // loop_footer
      %s20 = sadd.s32 1, %s16
    $region7: #{tpu_custom_call.1} parent=1 // loop_footer_branch
      %15 = sbr.rel target = $region3
    $region8: #{tpu_custom_call.1} parent=1 // loop_exit
      _
    %928 = vsyncpa [#allocation5], 1
    %s929 = scalar_lea.sflag [#allocation5], 1
    %930 = vsyncpa %s929, 1
    %931 = vsyncpa [#allocation8], 1
    %932 = vsyncpa [#allocation6], 1
    %s933 = scalar_lea.sflag [#allocation6], 1
    %934 = vsyncpa %s933, 1

</llo_original>
